<compile_context>
chip_gen: v7x
topology: tpu7x:2x2x1
jax: 0.10.0
libtpu: 0.0.40
codegen_flags: <defaults>
</compile_context>

<pallas_src>
import functools

import jax
import jax.numpy as jnp
from jax.experimental import pallas as pl
from jax.experimental.pallas import tpu as pltpu

LANE = 128


def _round_up(x, m):
    return ((x + m - 1) // m) * m


def mlp_kernel(x_ref, w1_ref, b1_ref, w2_ref, b2_ref, w3_ref, b3_ref, o_ref):
    # x_ref: (TB, 39) bf16; weights: (in, out) bf16; biases: (1, out) f32.
    x = x_ref[...]

    h1 = jnp.dot(x, w1_ref[...], preferred_element_type=jnp.float32) + b1_ref[...]
    h1 = jnp.maximum(h1, 0.0).astype(jnp.bfloat16)

    h2 = jnp.dot(h1, w2_ref[...], preferred_element_type=jnp.float32) + b2_ref[...]
    h2 = jnp.maximum(h2, 0.0).astype(jnp.bfloat16)

    h3 = jnp.dot(h2, w3_ref[...], preferred_element_type=jnp.float32) + b3_ref[...]
    o_ref[...] = jax.nn.sigmoid(h3)  # lane-dense (TB, 128) store


@functools.partial(jax.jit, static_argnames=("block_rows",))
def my_network_forward(x, params, *, block_rows=2048):
    """x: (B, ...) -> flattened to (B, 39). Returns (B, output_shape) f32."""
    B = x.shape[0]
    x2d = x.reshape(B, -1)           # nn.Flatten()
    in_dim = x2d.shape[1]            # 39

    # bf16 matmul operands (halves HBM traffic for the activation stream),
    # f32 accumulation + f32 biases/activations inside the kernel.
    x2d = x2d.astype(jnp.bfloat16)
    w1 = params["w1"].astype(jnp.bfloat16)
    w2 = params["w2"].astype(jnp.bfloat16)
    w3 = params["w3"].astype(jnp.bfloat16)
    b1 = params["b1"].astype(jnp.float32)
    b2 = params["b2"].astype(jnp.float32)
    b3 = params["b3"].astype(jnp.float32)
    out_dim = w3.shape[1]

    # Lane-dense output: pad the last layer to a multiple of 128 columns so the
    # output store is an unmasked vst, not a masked 10-lane partial store.
    out_pad = _round_up(out_dim, LANE)
    if out_pad != out_dim:
        w3 = jnp.pad(w3, ((0, 0), (0, out_pad - out_dim)))
        b3 = jnp.pad(b3, ((0, 0), (0, out_pad - out_dim)))

    # Batch tiling: TB is a multiple of 8 (sublane) and bounded so VMEM stays
    # comfortable on v7x's 64 MiB as well as v5e/v6e's 128 MiB. Pad B so TB
    # divides it exactly; padded rows are sliced off after the call.
    TB = min(block_rows, _round_up(B, 8))
    B_pad = _round_up(B, TB)
    if B_pad != B:
        x2d = jnp.pad(x2d, ((0, B_pad - B), (0, 0)))

    grid = (B_pad // TB,)

    def batch_spec(cols):
        return pl.BlockSpec((TB, cols), lambda i: (i, 0))

    def const_spec(arr):
        # Same block every grid step -> fetched once, stays VMEM-resident.
        return pl.BlockSpec(arr.shape, lambda i: (0, 0))

    out = pl.pallas_call(
        mlp_kernel,
        out_shape=jax.ShapeDtypeStruct((B_pad, out_pad), jnp.float32),
        grid=grid,
        in_specs=[
            batch_spec(in_dim),
            const_spec(w1), const_spec(b1),
            const_spec(w2), const_spec(b2),
            const_spec(w3), const_spec(b3),
        ],
        out_specs=batch_spec(out_pad),
        compiler_params=pltpu.CompilerParams(
            dimension_semantics=("parallel",),   # megacore on v7x
            vmem_limit_bytes=32 * 1024 * 1024,
        ),
    )(x2d, w1, b1, w2, b2, w3, b3)

    return out[:B, :out_dim]


def init_params(key, input_shape=39, hidden1=128, hidden2=64, output_shape=10):
    """Deterministic synthetic init (PyTorch-Linear-like uniform ranges)."""
    ks = jax.random.split(key, 6)

    def linear(kw, kb, fan_in, fan_out):
        bound = 1.0 / jnp.sqrt(fan_in)
        w = jax.random.uniform(kw, (fan_in, fan_out), jnp.float32, -bound, bound)
        b = jax.random.uniform(kb, (1, fan_out), jnp.float32, -bound, bound)
        return w, b

    w1, b1 = linear(ks[0], ks[1], input_shape, hidden1)
    w2, b2 = linear(ks[2], ks[3], hidden1, hidden2)
    w3, b3 = linear(ks[4], ks[5], hidden2, output_shape)
    return {"w1": w1, "b1": b1, "w2": w2, "b2": b2, "w3": w3, "b3": b3}


def _ref_bf16(x, p):
    """Reference matching the kernel's bf16-in / f32-accumulate numerics."""
    q = lambda a: a.astype(jnp.bfloat16).astype(jnp.float32)
    hp = jax.lax.Precision.HIGHEST
    h1 = jnp.maximum(jnp.dot(q(x), q(p["w1"]), precision=hp) + p["b1"], 0.0)
    h2 = jnp.maximum(jnp.dot(q(h1), q(p["w2"]), precision=hp) + p["b2"], 0.0)
    return jax.nn.sigmoid(jnp.dot(q(h2), q(p["w3"]), precision=hp) + p["b3"])


def _ref_f32(x, p):
    """Pure f32 reference (PyTorch-equivalent math)."""
    hp = jax.lax.Precision.HIGHEST
    h1 = jnp.maximum(jnp.dot(x, p["w1"], precision=hp) + p["b1"], 0.0)
    h2 = jnp.maximum(jnp.dot(h1, p["w2"], precision=hp) + p["b2"], 0.0)
    return jax.nn.sigmoid(jnp.dot(h2, p["w3"], precision=hp) + p["b3"])


if __name__ == "__main__":
    INPUT_SHAPE = 39
    OUTPUT_SHAPE = 10
    BATCH = 8

    key = jax.random.PRNGKey(0)
    k_params, k_x, k_x2 = jax.random.split(key, 3)

    params = init_params(k_params, INPUT_SHAPE, 128, 64, OUTPUT_SHAPE)

    # --- Small "serving" batch (single grid step) ---------------------------
    x = jax.random.normal(k_x, (BATCH, INPUT_SHAPE), dtype=jnp.float32)
    out = jax.block_until_ready(my_network_forward(x, params))
    assert out.shape == (BATCH, OUTPUT_SHAPE)
    assert jnp.allclose(out, _ref_bf16(x, params), atol=1e-4, rtol=1e-4)
    assert jnp.allclose(out, _ref_f32(x, params), atol=3e-2, rtol=3e-2)

    # --- Larger, non-tile-aligned batch (exercises grid + tail padding) -----
    B2 = 300
    x2 = jax.random.normal(k_x2, (B2, INPUT_SHAPE), dtype=jnp.float32)
    out2 = jax.block_until_ready(my_network_forward(x2, params, block_rows=128))
    assert out2.shape == (B2, OUTPUT_SHAPE)
    assert jnp.allclose(out2, _ref_bf16(x2, params), atol=1e-4, rtol=1e-4)
    assert jnp.allclose(out2, _ref_f32(x2, params), atol=3e-2, rtol=3e-2)

    print("KERNEL_OK")
</pallas_src>

<mosaic_0001>
module attributes {stable_mosaic.version = 11 : i64} {
  func.func @mlp_kernel(%arg0: i32, %arg1: memref<8x39xbf16, #tpu.memory_space<vmem>>, %arg2: memref<39x128xbf16, #tpu.memory_space<vmem>>, %arg3: memref<1x128xf32, #tpu.memory_space<vmem>>, %arg4: memref<128x64xbf16, #tpu.memory_space<vmem>>, %arg5: memref<1x64xf32, #tpu.memory_space<vmem>>, %arg6: memref<64x128xbf16, #tpu.memory_space<vmem>>, %arg7: memref<1x128xf32, #tpu.memory_space<vmem>>, %arg8: memref<8x128xf32, #tpu.memory_space<vmem>>) attributes {dimension_semantics = [#tpu.dimension_semantics<parallel>], iteration_bounds = array<i64: 1>, scalar_prefetch = 0 : i64, scratch_operands = 0 : i64, tpu.core_type = #tpu.core_type<tc>, window_params = [{transform_indices = @transform_0, window_bounds = array<i64: 8, 39>}, {pipeline_mode = #tpu.pipeline_mode<synchronous>, transform_indices = @transform_1, window_bounds = array<i64: 39, 128>}, {pipeline_mode = #tpu.pipeline_mode<synchronous>, transform_indices = @transform_2, window_bounds = array<i64: 1, 128>}, {pipeline_mode = #tpu.pipeline_mode<synchronous>, transform_indices = @transform_3, window_bounds = array<i64: 128, 64>}, {pipeline_mode = #tpu.pipeline_mode<synchronous>, transform_indices = @transform_4, window_bounds = array<i64: 1, 64>}, {pipeline_mode = #tpu.pipeline_mode<synchronous>, transform_indices = @transform_5, window_bounds = array<i64: 64, 128>}, {pipeline_mode = #tpu.pipeline_mode<synchronous>, transform_indices = @transform_6, window_bounds = array<i64: 1, 128>}, {transform_indices = @transform_7, window_bounds = array<i64: 8, 128>}]} {
    %c0 = arith.constant 0 : index
    %c0_0 = arith.constant 0 : index
    %0 = vector.load %arg1[%c0, %c0_0] : memref<8x39xbf16, #tpu.memory_space<vmem>>, vector<8x39xbf16>
    %c0_1 = arith.constant 0 : index
    %c0_2 = arith.constant 0 : index
    %1 = vector.load %arg2[%c0_1, %c0_2] : memref<39x128xbf16, #tpu.memory_space<vmem>>, vector<39x128xbf16>
    %cst = arith.constant dense<0.000000e+00> : vector<8x128xf32>
    %2 = tpu.matmul %0, %1, %cst {dimension_numbers = #tpu.dot_dimension_numbers<[1], [0], [0], [1], [0, 0, 1, 1], [], []>} : vector<8x39xbf16>, vector<39x128xbf16>, vector<8x128xf32> -> vector<8x128xf32>
    %c0_3 = arith.constant 0 : index
    %c0_4 = arith.constant 0 : index
    %3 = vector.load %arg3[%c0_3, %c0_4] : memref<1x128xf32, #tpu.memory_space<vmem>>, vector<1x128xf32>
    %4 = vector.broadcast %3 : vector<1x128xf32> to vector<8x128xf32>
    %5 = arith.addf %2, %4 : vector<8x128xf32>
    %cst_5 = arith.constant 0.000000e+00 : f32
    %6 = vector.broadcast %cst_5 : f32 to vector<8x128xf32>
    %7 = arith.maximumf %5, %6 : vector<8x128xf32>
    %8 = arith.truncf %7 : vector<8x128xf32> to vector<8x128xbf16>
    %c0_6 = arith.constant 0 : index
    %c0_7 = arith.constant 0 : index
    %9 = vector.load %arg4[%c0_6, %c0_7] : memref<128x64xbf16, #tpu.memory_space<vmem>>, vector<128x64xbf16>
    %cst_8 = arith.constant dense<0.000000e+00> : vector<8x64xf32>
    %10 = tpu.matmul %8, %9, %cst_8 {dimension_numbers = #tpu.dot_dimension_numbers<[1], [0], [0], [1], [0, 0, 1, 1], [], []>} : vector<8x128xbf16>, vector<128x64xbf16>, vector<8x64xf32> -> vector<8x64xf32>
    %c0_9 = arith.constant 0 : index
    %c0_10 = arith.constant 0 : index
    %11 = vector.load %arg5[%c0_9, %c0_10] : memref<1x64xf32, #tpu.memory_space<vmem>>, vector<1x64xf32>
    %12 = vector.broadcast %11 : vector<1x64xf32> to vector<8x64xf32>
    %13 = arith.addf %10, %12 : vector<8x64xf32>
    %cst_11 = arith.constant 0.000000e+00 : f32
    %14 = vector.broadcast %cst_11 : f32 to vector<8x64xf32>
    %15 = arith.maximumf %13, %14 : vector<8x64xf32>
    %16 = arith.truncf %15 : vector<8x64xf32> to vector<8x64xbf16>
    %c0_12 = arith.constant 0 : index
    %c0_13 = arith.constant 0 : index
    %17 = vector.load %arg6[%c0_12, %c0_13] : memref<64x128xbf16, #tpu.memory_space<vmem>>, vector<64x128xbf16>
    %cst_14 = arith.constant dense<0.000000e+00> : vector<8x128xf32>
    %18 = tpu.matmul %16, %17, %cst_14 {dimension_numbers = #tpu.dot_dimension_numbers<[1], [0], [0], [1], [0, 0, 1, 1], [], []>} : vector<8x64xbf16>, vector<64x128xbf16>, vector<8x128xf32> -> vector<8x128xf32>
    %c0_15 = arith.constant 0 : index
    %c0_16 = arith.constant 0 : index
    %19 = vector.load %arg7[%c0_15, %c0_16] : memref<1x128xf32, #tpu.memory_space<vmem>>, vector<1x128xf32>
    %20 = vector.broadcast %19 : vector<1x128xf32> to vector<8x128xf32>
    %21 = arith.addf %18, %20 : vector<8x128xf32>
    %22 = arith.negf %21 : vector<8x128xf32>
    %23 = math.exp %22 : vector<8x128xf32>
    %cst_17 = arith.constant 1.000000e+00 : f32
    %24 = vector.broadcast %cst_17 : f32 to vector<8x128xf32>
    %25 = arith.addf %24, %23 : vector<8x128xf32>
    %26 = arith.divf %24, %25 : vector<8x128xf32>
    %c0_18 = arith.constant 0 : index
    %c0_19 = arith.constant 0 : index
    %27 = vector.load %arg8[%c0_18, %c0_19] : memref<8x128xf32, #tpu.memory_space<vmem>>, vector<8x128xf32>
    tpu.vector_store %arg8[%c0_18, %c0_19], %26 {strides = array<i32>} : memref<8x128xf32, #tpu.memory_space<vmem>>, vector<8x128xf32>,
    return
  }
  func.func @transform_0(%arg0: i32) -> (i32, i32) {
    %c0_i32 = arith.constant 0 : i32
    %c0_i32_0 = arith.constant 0 : i32
    return %arg0, %c0_i32 : i32, i32
  }
  func.func @transform_1(%arg0: i32) -> (i32, i32) {
    %c0_i32 = arith.constant 0 : i32
    %c0_i32_0 = arith.constant 0 : i32
    %c0_i32_1 = arith.constant 0 : i32
    return %c0_i32, %c0_i32_0 : i32, i32
  }
  func.func @transform_2(%arg0: i32) -> (i32, i32) {
    %c0_i32 = arith.constant 0 : i32
    %c0_i32_0 = arith.constant 0 : i32
    %c0_i32_1 = arith.constant 0 : i32
    return %c0_i32, %c0_i32_0 : i32, i32
  }
  func.func @transform_3(%arg0: i32) -> (i32, i32) {
    %c0_i32 = arith.constant 0 : i32
    %c0_i32_0 = arith.constant 0 : i32
    %c0_i32_1 = arith.constant 0 : i32
    return %c0_i32, %c0_i32_0 : i32, i32
  }
  func.func @transform_4(%arg0: i32) -> (i32, i32) {
    %c0_i32 = arith.constant 0 : i32
    %c0_i32_0 = arith.constant 0 : i32
    %c0_i32_1 = arith.constant 0 : i32
    return %c0_i32, %c0_i32_0 : i32, i32
  }
  func.func @transform_5(%arg0: i32) -> (i32, i32) {
    %c0_i32 = arith.constant 0 : i32
    %c0_i32_0 = arith.constant 0 : i32
    %c0_i32_1 = arith.constant 0 : i32
    return %c0_i32, %c0_i32_0 : i32, i32
  }
  func.func @transform_6(%arg0: i32) -> (i32, i32) {
    %c0_i32 = arith.constant 0 : i32
    %c0_i32_0 = arith.constant 0 : i32
    %c0_i32_1 = arith.constant 0 : i32
    return %c0_i32, %c0_i32_0 : i32, i32
  }
  func.func @transform_7(%arg0: i32) -> (i32, i32) {
    %c0_i32 = arith.constant 0 : i32
    %c0_i32_0 = arith.constant 0 : i32
    return %arg0, %c0_i32 : i32, i32
  }
}

</mosaic_0001>

<llo_original>
// kernel: my_network_forward.1
$region0: #{my_network_forward.1}
  #allocation0 [shape = 'u32[]', space=smem, size = 0x4, offset = 0x4, fixed_abs, tag = 'smem constant byte address 0x4 - core index']
  #allocation1 [shape = 'u32[144,128]{1,0:T(1,128)}', space=vmem, size = 0x12000, scoped, tag = 'internal scratch']
  %s0 = inlined_call_operand.vmem [shape: bf16[8,39], index: 0, kind: input, shape index: {}]
  %s1 = inlined_call_operand.vmem [shape: bf16[39,128], index: 1, kind: input, shape index: {}]
  %s2 = inlined_call_operand.vmem [shape: f32[1,128], index: 2, kind: input, shape index: {}]
  %s3 = inlined_call_operand.vmem [shape: bf16[128,64], index: 3, kind: input, shape index: {}]
  %s4 = inlined_call_operand.vmem [shape: f32[1,64], index: 4, kind: input, shape index: {}]
  %s5 = inlined_call_operand.vmem [shape: bf16[64,128], index: 5, kind: input, shape index: {}]
  %s6 = inlined_call_operand.vmem [shape: f32[1,128], index: 6, kind: input, shape index: {}]
  %s7 = inlined_call_operand.hbm [shape: f32[8,128], index: 7, kind: output, shape index: {}]
  %s8 = sld [smem:[#allocation0]]
  $region38: #{my_network_forward.1} parent=0
    _
  %s10 = ssub.s32 1, %s8
  %s11 = scalar_select 0, %s10, %s8
  $region1: #{my_network_forward.1} parent=0
    #allocation2 [shape = 'u8[4096]{0}', space=vmem, size = 0x1000, scoped, tag = 'output window, operand 0, single buffered']
    #allocation3 [shape = 's32[1]{0}', space=sflag, size = 0x4, scoped, tag = 'scoped memory for my_network_forward.1']
    %12 = vsyncpa [#allocation3], 0
    // Predicated region
    $region2: #{my_network_forward.1} parent=1 // pred_check
      _
    $region3: #{my_network_forward.1} parent=1 // pred_check_branch
      %14 = sbr.rel (0) target = $region5
    $region4: #{my_network_forward.1} parent=1 // pred_region
      _
    $region5: #{my_network_forward.1} parent=1 // pred_fallthru
      _
    // Predicated region
    $region6: #{my_network_forward.1} parent=1 // pred_check
      _
    $region7: #{my_network_forward.1} parent=1 // pred_check_branch
      %16 = sbr.rel (0) target = $region9
    $region8: #{my_network_forward.1} parent=1 // pred_region
      _
    $region9: #{my_network_forward.1} parent=1 // pred_fallthru
      _
    // Predicated region
    $region10: #{my_network_forward.1} parent=1 // pred_check
      _
    $region11: #{my_network_forward.1} parent=1 // pred_check_branch
      %18 = sbr.rel (0) target = $region13
    $region12: #{my_network_forward.1} parent=1 // pred_region
      _
    $region13: #{my_network_forward.1} parent=1 // pred_fallthru
      _
    // Predicated region
    $region14: #{my_network_forward.1} parent=1 // pred_check
      _
    $region15: #{my_network_forward.1} parent=1 // pred_check_branch
      %20 = sbr.rel (0) target = $region17
    $region16: #{my_network_forward.1} parent=1 // pred_region
      _
    $region17: #{my_network_forward.1} parent=1 // pred_fallthru
      _
    // Predicated region
    $region18: #{my_network_forward.1} parent=1 // pred_check
      _
    $region19: #{my_network_forward.1} parent=1 // pred_check_branch
      %22 = sbr.rel (0) target = $region21
    $region20: #{my_network_forward.1} parent=1 // pred_region
      _
    $region21: #{my_network_forward.1} parent=1 // pred_fallthru
      _
    // Predicated region
    $region22: #{my_network_forward.1} parent=1 // pred_check
      _
    $region23: #{my_network_forward.1} parent=1 // pred_check_branch
      %24 = sbr.rel (0) target = $region25
    $region24: #{my_network_forward.1} parent=1 // pred_region
      _
    $region25: #{my_network_forward.1} parent=1 // pred_fallthru
      _
    // Predicated region
    $region26: #{my_network_forward.1} parent=1 // pred_check
      _
    $region27: #{my_network_forward.1} parent=1 // pred_check_branch
      %26 = sbr.rel (0) target = $region29
    $region28: #{my_network_forward.1} parent=1 // pred_region
      _
    $region29: #{my_network_forward.1} parent=1 // pred_fallthru
      _
    %v28 = vld [vmem:[%s0] sm:$0xf]
    %v29 = vld [vmem:[%s1] sm:$0xf]
    %v30 = vld [vmem:[%s1 + $0x4] sm:$0xf]
    %v31 = vld [vmem:[%s1 + $0x8] sm:$0xf]
    %v32 = vld [vmem:[%s1 + $0xc] sm:$0xf]
    %v33 = vld [vmem:[%s1 + $0x10] sm:$0xf]
    %v34 = vld [vmem:[%s2] sm:$0x1]
    %v36 = vlaneseq
    %v37 = vshrl.u32 %v36, 7
    %v38 = vsub.s32 0, %v37
    %v39 = vrot.slane %v34, %v38
    %v46 = vunpack.c.l.b16 %v29
    %v47 = vunpack.c.l.b16 %v30
    %v48 = vunpack.c.l.b16 %v31
    %v49 = vunpack.c.l.b16 %v32
    %v50 = vunpack.c.l.b16 %v33
    %v51 = vpack.c.b16 %v47, %v46
    %v52 = vpack.c.b16 %v49, %v48
    %v53 = vpack.c.b16 %v50, %v50
    %vm56 = vcmask 318464
    %v58 = vsel %vm56, %v28, 0
    %vm60 = vcmask 1042432
    %vm61 = vcmask 1043456
    %v62 = vsel %vm60, 4294967295, 65535
    %v63 = vsel %vm61, %v62, 0
    %v65 = vand.u32 %v53, %v63
    %67 = vmatprep.subr.bf16.mxu0 0
    %68 = vmatpush1.bf16.msra.mxu0 %v51
    %69 = vmatprep.subr.bf16.mxu0 0
    %70 = vmatpush1.bf16.msra.mxu0 %v52
    %71 = vmatprep.subr.bf16.mxu0 0
    %72 = vmatpush1.bf16.msra.mxu0 %v65
    %73 = vmatprep.subr.bf16.mxu0 0
    %74 = vmatpush1.bf16.msra.mxu0 0
    %75 = vmatprep.subr.bf16.mxu0 0
    %76 = vmatpush1.bf16.msra.mxu0 0
    %77 = vmatprep.subr.bf16.mxu0 0
    %78 = vmatpush1.bf16.msra.mxu0 0
    %79 = vmatprep.subr.bf16.mxu0 0
    %80 = vmatpush1.bf16.msra.mxu0 0
    %81 = vmatprep.subr.bf16.mxu0 0
    %82 = vmatpush1.bf16.msra.mxu0 0
    %83 = vmatprep.subr.bf16.mxu0 0
    %84 = vmatpush1.bf16.msra.mxu0 0
    %85 = vmatprep.subr.bf16.mxu0 0
    %86 = vmatpush1.bf16.msra.mxu0 0
    %87 = vmatprep.subr.bf16.mxu0 0
    %88 = vmatpush1.bf16.msra.mxu0 0
    %89 = vmatprep.subr.bf16.mxu0 0
    %90 = vmatpush1.bf16.msra.mxu0 0
    %91 = vmatprep.subr.bf16.mxu0 0
    %92 = vmatpush1.bf16.msra.mxu0 0
    %93 = vmatprep.subr.bf16.mxu0 0
    %94 = vmatpush1.bf16.msra.mxu0 0
    %95 = vmatprep.subr.bf16.mxu0 0
    %96 = vmatpush1.bf16.msra.mxu0 0
    %97 = vmatprep.subr.bf16.mxu0 0
    %98 = vmatpush1.bf16.msra.mxu0 0
    %99 = vmatprep.mubr.bf16.mxu0 0
    %100 = vmatmul.mubr.bf16.gmra.mrb[0].mxu0 %v58
    %v101 = vpop.f32.mrb[0].mxu0
    %v102 = vadd.f32 %v39, %v101
    %v103 = vpop.f32.mrb[0].mxu0
    %v104 = vpop.f32.mrb[0].mxu0
    %v105 = vpop.f32.mrb[0].mxu0
    %106 = vdwg.mxu0
    %v107 = vmax.f32 %v102, 0.0
    %v108 = vpack.c.bf16 %v107, %v107
    %v109 = vld [vmem:[%s3] sm:$0xf]
    %v110 = vld [vmem:[%s3 + $0x4] sm:$0xf]
    %v111 = vld [vmem:[%s3 + $0x8] sm:$0xf]
    %v112 = vld [vmem:[%s3 + $0xc] sm:$0xf]
    %v113 = vld [vmem:[%s3 + $0x10] sm:$0xf]
    %v114 = vld [vmem:[%s3 + $0x14] sm:$0xf]
    %v115 = vld [vmem:[%s3 + $0x18] sm:$0xf]
    %v116 = vld [vmem:[%s3 + $0x1c] sm:$0xf]
    %v117 = vld [vmem:[%s3 + $0x20] sm:$0xf]
    %v118 = vld [vmem:[%s3 + $0x24] sm:$0xf]
    %v119 = vld [vmem:[%s3 + $0x28] sm:$0xf]
    %v120 = vld [vmem:[%s3 + $0x2c] sm:$0xf]
    %v121 = vld [vmem:[%s3 + $0x30] sm:$0xf]
    %v122 = vld [vmem:[%s3 + $0x34] sm:$0xf]
    %v123 = vld [vmem:[%s3 + $0x38] sm:$0xf]
    %v124 = vld [vmem:[%s3 + $0x3c] sm:$0xf]
    %v125 = vld [vmem:[%s4] sm:$0x1]
    %v127 = vlaneseq
    %v128 = vshrl.u32 %v127, 7
    %v129 = vsub.s32 0, %v128
    %v130 = vrot.slane %v125, %v129
    %v148 = vunpack.c.l.b16 %v109
    %v149 = vunpack.c.l.b16 %v110
    %v150 = vunpack.c.l.b16 %v111
    %v151 = vunpack.c.l.b16 %v112
    %v152 = vunpack.c.l.b16 %v113
    %v153 = vunpack.c.l.b16 %v114
    %v154 = vunpack.c.l.b16 %v115
    %v155 = vunpack.c.l.b16 %v116
    %v156 = vunpack.c.l.b16 %v117
    %v157 = vunpack.c.l.b16 %v118
    %v158 = vunpack.c.l.b16 %v119
    %v159 = vunpack.c.l.b16 %v120
    %v160 = vunpack.c.l.b16 %v121
    %v161 = vunpack.c.l.b16 %v122
    %v162 = vunpack.c.l.b16 %v123
    %v163 = vunpack.c.l.b16 %v124
    %v164 = vpack.c.b16 %v149, %v148
    %v165 = vpack.c.b16 %v151, %v150
    %v166 = vpack.c.b16 %v153, %v152
    %v167 = vpack.c.b16 %v155, %v154
    %v168 = vpack.c.b16 %v157, %v156
    %v169 = vpack.c.b16 %v159, %v158
    %v170 = vpack.c.b16 %v161, %v160
    %v171 = vpack.c.b16 %v163, %v162
    %180 = vmatprep.subr.bf16.mxu0 0
    %181 = vmatpush1.bf16.msra.mxu0 %v164
    %182 = vmatprep.subr.bf16.mxu0 0
    %183 = vmatpush1.bf16.msra.mxu0 %v165
    %184 = vmatprep.subr.bf16.mxu0 0
    %185 = vmatpush1.bf16.msra.mxu0 %v166
    %186 = vmatprep.subr.bf16.mxu0 0
    %187 = vmatpush1.bf16.msra.mxu0 %v167
    %188 = vmatprep.subr.bf16.mxu0 0
    %189 = vmatpush1.bf16.msra.mxu0 %v168
    %190 = vmatprep.subr.bf16.mxu0 0
    %191 = vmatpush1.bf16.msra.mxu0 %v169
    %192 = vmatprep.subr.bf16.mxu0 0
    %193 = vmatpush1.bf16.msra.mxu0 %v170
    %194 = vmatprep.subr.bf16.mxu0 0
    %195 = vmatpush1.bf16.msra.mxu0 %v171
    %196 = vmatprep.subr.bf16.mxu0 0
    %197 = vmatpush1.bf16.msra.mxu0 0
    %198 = vmatprep.subr.bf16.mxu0 0
    %199 = vmatpush1.bf16.msra.mxu0 0
    %200 = vmatprep.subr.bf16.mxu0 0
    %201 = vmatpush1.bf16.msra.mxu0 0
    %202 = vmatprep.subr.bf16.mxu0 0
    %203 = vmatpush1.bf16.msra.mxu0 0
    %204 = vmatprep.subr.bf16.mxu0 0
    %205 = vmatpush1.bf16.msra.mxu0 0
    %206 = vmatprep.subr.bf16.mxu0 0
    %207 = vmatpush1.bf16.msra.mxu0 0
    %208 = vmatprep.subr.bf16.mxu0 0
    %209 = vmatpush1.bf16.msra.mxu0 0
    %210 = vmatprep.subr.bf16.mxu0 0
    %211 = vmatpush1.bf16.msra.mxu0 0
    %212 = vmatprep.mubr.bf16.mxu0 0
    %213 = vmatmul.mubr.bf16.gmra.mrb[0].mxu0 %v108
    %v214 = vpop.f32.mrb[0].mxu0
    %v215 = vadd.f32 %v130, %v214
    %v216 = vpop.f32.mrb[0].mxu0
    %v217 = vpop.f32.mrb[0].mxu0
    %v218 = vpop.f32.mrb[0].mxu0
    %219 = vdwg.mxu0
    %v220 = vmax.f32 %v215, 0.0
    %v221 = vpack.c.bf16 %v220, %v220
    %v222 = vld [vmem:[%s5] sm:$0xf]
    %v223 = vld [vmem:[%s5 + $0x4] sm:$0xf]
    %v224 = vld [vmem:[%s5 + $0x8] sm:$0xf]
    %v225 = vld [vmem:[%s5 + $0xc] sm:$0xf]
    %v226 = vld [vmem:[%s5 + $0x10] sm:$0xf]
    %v227 = vld [vmem:[%s5 + $0x14] sm:$0xf]
    %v228 = vld [vmem:[%s5 + $0x18] sm:$0xf]
    %v229 = vld [vmem:[%s5 + $0x1c] sm:$0xf]
    %v230 = vld [vmem:[%s6] sm:$0x1]
    %v232 = vlaneseq
    %v233 = vshrl.u32 %v232, 7
    %v234 = vsub.s32 0, %v233
    %v235 = vrot.slane %v230, %v234
    %v245 = vunpack.c.l.b16 %v222
    %v246 = vunpack.c.l.b16 %v223
    %v247 = vunpack.c.l.b16 %v224
    %v248 = vunpack.c.l.b16 %v225
    %v249 = vunpack.c.l.b16 %v226
    %v250 = vunpack.c.l.b16 %v227
    %v251 = vunpack.c.l.b16 %v228
    %v252 = vunpack.c.l.b16 %v229
    %v253 = vpack.c.b16 %v246, %v245
    %v254 = vpack.c.b16 %v248, %v247
    %v255 = vpack.c.b16 %v250, %v249
    %v256 = vpack.c.b16 %v252, %v251
    %vm261 = vcmask 523264
    %v263 = vsel %vm261, %v221, 0
    %265 = vmatprep.subr.bf16.mxu0 0
    %266 = vmatpush1.bf16.msra.mxu0 %v253
    %267 = vmatprep.subr.bf16.mxu0 0
    %268 = vmatpush1.bf16.msra.mxu0 %v254
    %269 = vmatprep.subr.bf16.mxu0 0
    %270 = vmatpush1.bf16.msra.mxu0 %v255
    %271 = vmatprep.subr.bf16.mxu0 0
    %272 = vmatpush1.bf16.msra.mxu0 %v256
    %273 = vmatprep.subr.bf16.mxu0 0
    %274 = vmatpush1.bf16.msra.mxu0 0
    %275 = vmatprep.subr.bf16.mxu0 0
    %276 = vmatpush1.bf16.msra.mxu0 0
    %277 = vmatprep.subr.bf16.mxu0 0
    %278 = vmatpush1.bf16.msra.mxu0 0
    %279 = vmatprep.subr.bf16.mxu0 0
    %280 = vmatpush1.bf16.msra.mxu0 0
    %281 = vmatprep.subr.bf16.mxu0 0
    %282 = vmatpush1.bf16.msra.mxu0 0
    %283 = vmatprep.subr.bf16.mxu0 0
    %284 = vmatpush1.bf16.msra.mxu0 0
    %285 = vmatprep.subr.bf16.mxu0 0
    %286 = vmatpush1.bf16.msra.mxu0 0
    %287 = vmatprep.subr.bf16.mxu0 0
    %288 = vmatpush1.bf16.msra.mxu0 0
    %289 = vmatprep.subr.bf16.mxu0 0
    %290 = vmatpush1.bf16.msra.mxu0 0
    %291 = vmatprep.subr.bf16.mxu0 0
    %292 = vmatpush1.bf16.msra.mxu0 0
    %293 = vmatprep.subr.bf16.mxu0 0
    %294 = vmatpush1.bf16.msra.mxu0 0
    %295 = vmatprep.subr.bf16.mxu0 0
    %296 = vmatpush1.bf16.msra.mxu0 0
    %297 = vmatprep.mubr.bf16.mxu0 0
    %298 = vmatmul.mubr.bf16.gmra.mrb[0].mxu0 %v263
    %v299 = vpop.f32.mrb[0].mxu0
    %v300 = vadd.f32 %v235, %v299
    %v301 = vpop.f32.mrb[0].mxu0
    %v302 = vpop.f32.mrb[0].mxu0
    %v303 = vpop.f32.mrb[0].mxu0
    %304 = vdwg.mxu0
    %v305 = vxor.u32 %v300, 2147483648
    %v306 = vmul.f32 %v305, 1.442695
    %v307 = vpow.pop %v306
    %v308 = vadd.f32 %v307, 1.0
    %v309 = vrcp.pop %v308
    %v310 = vmul.f32 1.0, %v309
    %311 = vst [vmem:[#allocation2] sm:$0xff] %v310
    // Predicated region
    $region30: #{my_network_forward.1} parent=1 // pred_check
      _
    $region31: #{my_network_forward.1} parent=1 // pred_check_branch
      %313 = sbr.rel (0) target = $region33
    $region32: #{my_network_forward.1} parent=1 // pred_region
      %s315 = ssub.s32 128, 128
      %316 = vsyncadd [#allocation3], %s315
      %s318 = sshll.u32 [#allocation2], 4
      %s319 = int_to_ptr.vmem [resolvable:$true] %s318
      %321 = dma.vmem_to_hbm [thread:$0]  %s319, 128, %s7, [#allocation3]
    $region33: #{my_network_forward.1} parent=1 // pred_fallthru
      _
    // Predicated region
    $region34: #{my_network_forward.1} parent=1 // pred_check
      _
    $region35: #{my_network_forward.1} parent=1 // pred_check_branch
      %323 = sbr.rel (0) target = $region37
    $region36: #{my_network_forward.1} parent=1 // pred_region
      %324 = dma.done [#allocation3], 128
    $region37: #{my_network_forward.1} parent=1 // pred_fallthru
      _
    %325 = vsyncpa [#allocation3], 1

</llo_original>
